<compile_context>
chip_gen: v7x
topology: tpu7x:2x2x1
jax: 0.10.0
libtpu: 0.0.40
codegen_flags: <defaults>
</compile_context>

<pallas_src>
import jax
import jax.numpy as jnp
import numpy as np
from jax.experimental import pallas as pl
from jax.experimental.pallas import tpu as pltpu

WINDOW = 35          # module asserts window == 35
WPAD = 40            # window padded up to a sublane multiple of 8
OUT_ROWS = 8         # output sublane rows; logits live in rows [:ACTION_SPACE]
ACTION_SPACE = 3
HIDDEN_SIZE = 32     # stored by the module but unused in forward()
NEG_SLOPE = 0.01     # nn.LeakyReLU default

assert ACTION_SPACE <= OUT_ROWS


def _round_up(n, m):
    return ((n + m - 1) // m) * m


def _leaky_relu(v):
    return jnp.where(v >= 0, v, NEG_SLOPE * v)


# --------------------------------------------------------------------------
# Kernel
# --------------------------------------------------------------------------
def _cnn1d_kernel(scal_ref, x_ref, fcw_ref, fcb_ref, out_ref):
    # scal_ref: SMEM f32[5] = [cv1_w, cv1_b, cv2_w0, cv2_w1, cv2_b]
    w1 = scal_ref[0]
    b1 = scal_ref[1]
    w2_0 = scal_ref[2]
    w2_1 = scal_ref[3]
    b2 = scal_ref[4]

    x = x_ref[...]                                   # (WPAD, TB): window on sublanes

    # Conv1d(1,1,k=1) + LeakyReLU (pointwise, full-lane VPU work).
    y1 = _leaky_relu(w1 * x + b1)                    # (WPAD, TB)

    # In-kernel shift for the k=2 conv: y1s[i, :] = y1[(i+1) % WPAD, :].
    # Sublane rotation runs on the XLU (idle in this kernel) and replaces the
    # old host-materialized shifted copy of x.
    y1s = pltpu.roll(y1, shift=WPAD - 1, axis=0)     # (WPAD, TB)

    # Conv1d(1,1,k=2) + LeakyReLU. Rows >= 34 are garbage (zero-padding / wrap)
    # and are killed by the zero columns of the padded FC weight below.
    y2 = _leaky_relu(w2_0 * y1 + w2_1 * y1s + b2)    # (WPAD, TB)

    # Linear(34, action_space): (OUT_ROWS, WPAD) @ (WPAD, TB) on the MXU.
    # fcw columns >= 34 are zero (kills padded rows); rows >= ACTION_SPACE are
    # zero (unused output sublanes).
    out = jnp.dot(fcw_ref[...], y2, preferred_element_type=jnp.float32)
    out_ref[...] = out + fcb_ref[...]                # (OUT_ROWS, TB); (8,1) bias lane-broadcast


# --------------------------------------------------------------------------
# Parameter packing (one-time, host side)
# --------------------------------------------------------------------------
def prepare_params(params):
    """One-time host-side packing of module parameters into kernel layout."""
    scal = jnp.stack(
        [params["cv1_w"], params["cv1_b"],
         params["cv2_w"][0], params["cv2_w"][1],
         params["cv2_b"]]
    ).astype(jnp.float32)                             # (5,) SMEM scalars

    fc1_w = jnp.asarray(params["fc1_w"], jnp.float32)  # (ACTION_SPACE, 34)
    assert fc1_w.shape == (ACTION_SPACE, WINDOW - 1)

    # Transposed-layout FC weight: (OUT_ROWS, WPAD).
    # IMPORTANT: columns >= WINDOW-1 (=34) and rows >= ACTION_SPACE MUST remain
    # zero -- they mask out the conv padding/wrap rows and the unused output
    # sublanes. Do not repack without preserving this.
    fcw = jnp.zeros((OUT_ROWS, WPAD), jnp.float32)
    fcw = fcw.at[:ACTION_SPACE, : WINDOW - 1].set(fc1_w)

    fcb = jnp.zeros((OUT_ROWS, 1), jnp.float32)
    fcb = fcb.at[:ACTION_SPACE, 0].set(jnp.asarray(params["fc1_b"], jnp.float32))
    return scal, fcw, fcb


# --------------------------------------------------------------------------
# pallas_call wrapper
# --------------------------------------------------------------------------
def _choose_tb(batch):
    """Lane-block (windows per grid step). Small batches: one 128-lane block.
    Large batches: 1024 lanes (~160 KiB input block) -- at the HBM roofline on
    v6e and safely inside v7x's 32 MiB scoped VMEM even double-buffered."""
    if batch <= 512:
        return 128
    return 1024


def _forward_batched(xt, scal, fcw, fcb, tb):
    """xt: (WPAD, Bp) f32 with Bp % tb == 0.  Returns (OUT_ROWS, Bp) f32."""
    _, bp = xt.shape
    grid = (bp // tb,)
    return pl.pallas_call(
        _cnn1d_kernel,
        out_shape=jax.ShapeDtypeStruct((OUT_ROWS, bp), jnp.float32),
        grid=grid,
        in_specs=[
            pl.BlockSpec(memory_space=pltpu.MemorySpace.SMEM),      # conv scalars
            pl.BlockSpec((WPAD, tb), lambda i: (0, i)),             # x block (batch on lanes)
            pl.BlockSpec((OUT_ROWS, WPAD), lambda i: (0, 0)),       # fc1 W, VMEM-resident
            pl.BlockSpec((OUT_ROWS, 1), lambda i: (0, 0)),          # fc1 b, VMEM-resident
        ],
        out_specs=pl.BlockSpec((OUT_ROWS, tb), lambda i: (0, i)),
        compiler_params=pltpu.CompilerParams(
            dimension_semantics=("parallel",)),                     # v7x: shard across both TCs
    )(scal, xt, fcw, fcb)


@jax.jit
def _forward_impl(x, hidden_threshold, scal, fcw, fcb):
    x = jnp.asarray(x, jnp.float32)
    single = (x.ndim == 1)
    xb = x.reshape(-1, WINDOW)                        # (B, 35)
    b = xb.shape[0]
    tb = _choose_tb(b)
    bp = _round_up(b, tb)

    # (B, 35) -> (WPAD, Bp): window on sublanes (padded 35->40 with zeros),
    # batch on lanes (padded to a multiple of the lane block).
    # TODO(synk): try pltpu.CompilerParams(allow_input_fusion=...) so this
    # pad+transpose producer fuses into the pallas custom call instead of
    # materializing a separate HBM array on the small-B latency path.
    xt = jnp.pad(xb, ((0, bp - b), (0, WPAD - WINDOW))).T   # (WPAD, Bp)

    out = _forward_batched(xt, scal, fcw, fcb, tb)    # (OUT_ROWS, Bp)
    logits = out[:ACTION_SPACE, :b].T                 # (B, ACTION_SPACE)
    if single:
        logits = logits.reshape(ACTION_SPACE)
    return logits, hidden_threshold


def model_cnn1d_forward(x, hidden_threshold, prepared):
    """Pallas forward.

    x: (35,) single window  -> logits (ACTION_SPACE,)
       (B, 35) batch        -> logits (B, ACTION_SPACE)
    Returns (logits, hidden_threshold) exactly like the PyTorch module.
    """
    scal, fcw, fcb = prepared
    return _forward_impl(x, hidden_threshold, scal, fcw, fcb)


# --------------------------------------------------------------------------
# Pure-JAX reference + parameter init (for the self-test)
# --------------------------------------------------------------------------
def _reference_forward_single(xf, params):
    """Pure-JAX reference mirroring the PyTorch module for one window."""
    xf = jnp.asarray(xf, jnp.float32).reshape(WINDOW)
    y1 = _leaky_relu(params["cv1_w"] * xf + params["cv1_b"])
    y2 = _leaky_relu(params["cv2_w"][0] * y1[: WINDOW - 1]
                     + params["cv2_w"][1] * y1[1:WINDOW]
                     + params["cv2_b"])
    return params["fc1_w"] @ y2 + params["fc1_b"]


def _reference_forward_batch(xb, params):
    return jax.vmap(lambda xi: _reference_forward_single(xi, params))(xb)


def _init_params(key):
    k = jax.random.split(key, 6)
    return {
        # Conv1d(1,1,k=1): weight (1,1,1) -> scalar, bias (1,) -> scalar
        "cv1_w": jax.random.normal(k[0], (), jnp.float32) * 0.5,
        "cv1_b": jax.random.normal(k[1], (), jnp.float32) * 0.1,
        # Conv1d(1,1,k=2): weight (1,1,2) -> (2,), bias (1,) -> scalar
        "cv2_w": jax.random.normal(k[2], (2,), jnp.float32) * 0.5,
        "cv2_b": jax.random.normal(k[3], (), jnp.float32) * 0.1,
        # Linear(34, action_space)
        "fc1_w": jax.random.normal(k[4], (ACTION_SPACE, WINDOW - 1), jnp.float32) * 0.2,
        "fc1_b": jax.random.normal(k[5], (ACTION_SPACE,), jnp.float32) * 0.1,
    }


if __name__ == "__main__":
    key = jax.random.PRNGKey(0)
    kx, kh, kp = jax.random.split(key, 3)

    B = 8                                             # small batch of windows
    xb = jax.random.normal(kx, (B, WINDOW), jnp.float32)
    hidden_threshold = jax.random.normal(kh, (1, HIDDEN_SIZE), jnp.float32)
    params = _init_params(kp)
    prepared = prepare_params(params)

    # Batched path (single grid step)
    logits_b, hidden_out = model_cnn1d_forward(xb, hidden_threshold, prepared)
    jax.block_until_ready(logits_b)
    jax.block_until_ready(hidden_out)
    assert logits_b.shape == (B, ACTION_SPACE)

    ref_b = _reference_forward_batch(xb, params)
    np.testing.assert_allclose(np.asarray(logits_b), np.asarray(ref_b),
                               rtol=1e-5, atol=1e-5)
    np.testing.assert_allclose(np.asarray(hidden_out), np.asarray(hidden_threshold))

    # Single-window path (matches the PyTorch module exactly)
    x1 = xb[0]
    logits_1, hidden_out_1 = model_cnn1d_forward(x1, hidden_threshold, prepared)
    jax.block_until_ready(logits_1)
    assert logits_1.shape == (ACTION_SPACE,)
    np.testing.assert_allclose(np.asarray(logits_1),
                               np.asarray(_reference_forward_single(x1, params)),
                               rtol=1e-5, atol=1e-5)
    np.testing.assert_allclose(np.asarray(hidden_out_1), np.asarray(hidden_threshold))

    # Slightly larger batch: exercises batch padding and a multi-step grid
    # (B=200 -> Bp=256, two 128-lane blocks).
    B2 = 200
    xb2 = jax.random.normal(jax.random.PRNGKey(1), (B2, WINDOW), jnp.float32)
    logits_b2, _ = model_cnn1d_forward(xb2, hidden_threshold, prepared)
    jax.block_until_ready(logits_b2)
    assert logits_b2.shape == (B2, ACTION_SPACE)
    ref_b2 = _reference_forward_batch(xb2, params)
    np.testing.assert_allclose(np.asarray(logits_b2), np.asarray(ref_b2),
                               rtol=1e-5, atol=1e-5)

    print("KERNEL_OK")
</pallas_src>

<mosaic_0001>
module attributes {stable_mosaic.version = 11 : i64} {
  func.func @_cnn1d_kernel(%arg0: i32, %arg1: memref<5xf32, #tpu.memory_space<smem>>, %arg2: memref<40x128xf32, #tpu.memory_space<vmem>>, %arg3: memref<8x40xf32, #tpu.memory_space<vmem>>, %arg4: memref<8x1xf32, #tpu.memory_space<vmem>>, %arg5: memref<8x128xf32, #tpu.memory_space<vmem>>) attributes {dimension_semantics = [#tpu.dimension_semantics<parallel>], iteration_bounds = array<i64: 1>, scalar_prefetch = 0 : i64, scratch_operands = 0 : i64, tpu.core_type = #tpu.core_type<tc>, window_params = [{transform_indices = @transform_0, window_bounds = array<i64: 5>}, {transform_indices = @transform_1, window_bounds = array<i64: 40, 128>}, {pipeline_mode = #tpu.pipeline_mode<synchronous>, transform_indices = @transform_2, window_bounds = array<i64: 8, 40>}, {pipeline_mode = #tpu.pipeline_mode<synchronous>, transform_indices = @transform_3, window_bounds = array<i64: 8, 1>}, {transform_indices = @transform_4, window_bounds = array<i64: 8, 128>}]} {
    %c0 = arith.constant 0 : index
    %0 = memref.load %arg1[%c0] : memref<5xf32, #tpu.memory_space<smem>>
    %c1 = arith.constant 1 : index
    %1 = memref.load %arg1[%c1] : memref<5xf32, #tpu.memory_space<smem>>
    %c2 = arith.constant 2 : index
    %2 = memref.load %arg1[%c2] : memref<5xf32, #tpu.memory_space<smem>>
    %c3 = arith.constant 3 : index
    %3 = memref.load %arg1[%c3] : memref<5xf32, #tpu.memory_space<smem>>
    %c4 = arith.constant 4 : index
    %4 = memref.load %arg1[%c4] : memref<5xf32, #tpu.memory_space<smem>>
    %c0_0 = arith.constant 0 : index
    %c0_1 = arith.constant 0 : index
    %5 = vector.load %arg2[%c0_0, %c0_1] : memref<40x128xf32, #tpu.memory_space<vmem>>, vector<40x128xf32>
    %6 = vector.broadcast %0 : f32 to vector<40x128xf32>
    %7 = arith.mulf %6, %5 : vector<40x128xf32>
    %8 = vector.broadcast %1 : f32 to vector<40x128xf32>
    %9 = arith.addf %7, %8 : vector<40x128xf32>
    %cst = arith.constant 0.000000e+00 : f32
    %10 = vector.broadcast %cst : f32 to vector<40x128xf32>
    %11 = arith.cmpf oge, %9, %10 : vector<40x128xf32>
    %cst_2 = arith.constant 0.00999999977 : f32
    %12 = vector.broadcast %cst_2 : f32 to vector<40x128xf32>
    %13 = arith.mulf %12, %9 : vector<40x128xf32>
    %14 = arith.select %11, %9, %13 : vector<40x128xi1>, vector<40x128xf32>
    %c39_i32 = arith.constant 39 : i32
    %15 = tpu.dynamic_rotate %14 by %c39_i32 dim 0 : vector<40x128xf32>, i32 -> vector<40x128xf32>
    %16 = vector.broadcast %2 : f32 to vector<40x128xf32>
    %17 = arith.mulf %16, %14 : vector<40x128xf32>
    %18 = vector.broadcast %3 : f32 to vector<40x128xf32>
    %19 = arith.mulf %18, %15 : vector<40x128xf32>
    %20 = arith.addf %17, %19 : vector<40x128xf32>
    %21 = vector.broadcast %4 : f32 to vector<40x128xf32>
    %22 = arith.addf %20, %21 : vector<40x128xf32>
    %cst_3 = arith.constant 0.000000e+00 : f32
    %23 = vector.broadcast %cst_3 : f32 to vector<40x128xf32>
    %24 = arith.cmpf oge, %22, %23 : vector<40x128xf32>
    %cst_4 = arith.constant 0.00999999977 : f32
    %25 = vector.broadcast %cst_4 : f32 to vector<40x128xf32>
    %26 = arith.mulf %25, %22 : vector<40x128xf32>
    %27 = arith.select %24, %22, %26 : vector<40x128xi1>, vector<40x128xf32>
    %c0_5 = arith.constant 0 : index
    %c0_6 = arith.constant 0 : index
    %28 = vector.load %arg3[%c0_5, %c0_6] : memref<8x40xf32, #tpu.memory_space<vmem>>, vector<8x40xf32>
    %cst_7 = arith.constant dense<0.000000e+00> : vector<8x128xf32>
    %29 = tpu.matmul %28, %27, %cst_7 {dimension_numbers = #tpu.dot_dimension_numbers<[1], [0], [0], [1], [0, 0, 1, 1], [], []>} : vector<8x40xf32>, vector<40x128xf32>, vector<8x128xf32> -> vector<8x128xf32>
    %c0_8 = arith.constant 0 : index
    %c0_9 = arith.constant 0 : index
    %30 = vector.load %arg4[%c0_8, %c0_9] : memref<8x1xf32, #tpu.memory_space<vmem>>, vector<8x1xf32>
    %31 = vector.broadcast %30 : vector<8x1xf32> to vector<8x128xf32>
    %32 = arith.addf %29, %31 : vector<8x128xf32>
    %c0_10 = arith.constant 0 : index
    %c0_11 = arith.constant 0 : index
    %33 = vector.load %arg5[%c0_10, %c0_11] : memref<8x128xf32, #tpu.memory_space<vmem>>, vector<8x128xf32>
    tpu.vector_store %arg5[%c0_10, %c0_11], %32 {strides = array<i32>} : memref<8x128xf32, #tpu.memory_space<vmem>>, vector<8x128xf32>,
    return
  }
  func.func @transform_0(%arg0: i32) -> i32 {
    %c0_i32 = arith.constant 0 : i32
    %c0_i32_0 = arith.constant 0 : i32
    return %c0_i32 : i32
  }
  func.func @transform_1(%arg0: i32) -> (i32, i32) {
    %c0_i32 = arith.constant 0 : i32
    %c0_i32_0 = arith.constant 0 : i32
    return %c0_i32, %arg0 : i32, i32
  }
  func.func @transform_2(%arg0: i32) -> (i32, i32) {
    %c0_i32 = arith.constant 0 : i32
    %c0_i32_0 = arith.constant 0 : i32
    %c0_i32_1 = arith.constant 0 : i32
    return %c0_i32, %c0_i32_0 : i32, i32
  }
  func.func @transform_3(%arg0: i32) -> (i32, i32) {
    %c0_i32 = arith.constant 0 : i32
    %c0_i32_0 = arith.constant 0 : i32
    %c0_i32_1 = arith.constant 0 : i32
    return %c0_i32, %c0_i32_0 : i32, i32
  }
  func.func @transform_4(%arg0: i32) -> (i32, i32) {
    %c0_i32 = arith.constant 0 : i32
    %c0_i32_0 = arith.constant 0 : i32
    return %c0_i32, %arg0 : i32, i32
  }
}

</mosaic_0001>

<llo_original>
// kernel: _forward_impl.1
$region0: #{_forward_impl.1}
  #allocation0 [shape = 'u32[]', space=smem, size = 0x4, offset = 0x4, fixed_abs, tag = 'smem constant byte address 0x4 - core index']
  #allocation1 [shape = 'u32[144,128]{1,0:T(1,128)}', space=vmem, size = 0x12000, scoped, tag = 'internal scratch']
  %s0 = inlined_call_operand.vmem [shape: f32[5], index: 0, kind: input, shape index: {}]
  %s1 = inlined_call_operand.vmem [shape: f32[40,128], index: 1, kind: input, shape index: {}]
  %s2 = inlined_call_operand.vmem [shape: f32[8,40], index: 2, kind: input, shape index: {}]
  %s3 = inlined_call_operand.vmem [shape: f32[8,1], index: 3, kind: input, shape index: {}]
  %s4 = inlined_call_operand.vmem [shape: f32[8,128], index: 4, kind: output, shape index: {}]
  %s5 = sld [smem:[#allocation0]]
  $region30: #{_forward_impl.1} parent=0
    _
  %s7 = ssub.s32 1, %s5
  %s8 = scalar_select 0, %s7, %s5
  $region1: #{_forward_impl.1} parent=0
    #allocation2 [shape = 'u8[512]{0}', space=smem, size = 0x200, scoped, tag = 'input window, operand 0, single buffered']
    #allocation3 [shape = 's32[1]{0}', space=sflag, size = 0x4, scoped, tag = 'scoped memory for _forward_impl.1']
    %9 = vsyncpa [#allocation3], 0
    // Predicated region
    $region2: #{_forward_impl.1} parent=1 // pred_check
      _
    $region3: #{_forward_impl.1} parent=1 // pred_check_branch
      %11 = sbr.rel (0) target = $region5
    $region4: #{_forward_impl.1} parent=1 // pred_region
      %s13 = ssub.s32 16, 16
      %14 = vsyncadd [#allocation3], %s13
      %s16 = sshll.u32 %s0, 4
      %s17 = int_to_ptr.vmem [resolvable:$true] %s16
      %19 = dma.vmem_to_smem %s17, 16, [#allocation2], [#allocation3]
    $region5: #{_forward_impl.1} parent=1 // pred_fallthru
      _
    // Predicated region
    $region6: #{_forward_impl.1} parent=1 // pred_check
      _
    $region7: #{_forward_impl.1} parent=1 // pred_check_branch
      %21 = sbr.rel (0) target = $region9
    $region8: #{_forward_impl.1} parent=1 // pred_region
      _
    $region9: #{_forward_impl.1} parent=1 // pred_fallthru
      _
    // Predicated region
    $region10: #{_forward_impl.1} parent=1 // pred_check
      _
    $region11: #{_forward_impl.1} parent=1 // pred_check_branch
      %23 = sbr.rel (0) target = $region13
    $region12: #{_forward_impl.1} parent=1 // pred_region
      _
    $region13: #{_forward_impl.1} parent=1 // pred_fallthru
      _
    // Predicated region
    $region14: #{_forward_impl.1} parent=1 // pred_check
      _
    $region15: #{_forward_impl.1} parent=1 // pred_check_branch
      %25 = sbr.rel (0) target = $region17
    $region16: #{_forward_impl.1} parent=1 // pred_region
      _
    $region17: #{_forward_impl.1} parent=1 // pred_fallthru
      _
    // Predicated region
    $region18: #{_forward_impl.1} parent=1 // pred_check
      _
    $region19: #{_forward_impl.1} parent=1 // pred_check_branch
      %27 = sbr.rel (0) target = $region21
    $region20: #{_forward_impl.1} parent=1 // pred_region
      %28 = dma.done [#allocation3], 16
    $region21: #{_forward_impl.1} parent=1 // pred_fallthru
      _
    %29 = sfence
    %s30 = sld [smem:[#allocation2]]
    %s31 = sld [smem:[#allocation2 + $0x1]]
    %s32 = sld [smem:[#allocation2 + $0x2]]
    %s33 = sld [smem:[#allocation2 + $0x3]]
    %s34 = sld [smem:[#allocation2 + $0x4]]
    %v35 = vld [vmem:[%s1] sm:$0xff]
    %v36 = vld [vmem:[%s1 + $0x8] sm:$0xff]
    %v37 = vld [vmem:[%s1 + $0x10] sm:$0xff]
    %v38 = vld [vmem:[%s1 + $0x18] sm:$0xff]
    %v39 = vld [vmem:[%s1 + $0x20] sm:$0xff]
    %v40 = vstv %s30
    %v41 = vmul.f32 %v40, %v35
    %v42 = vmul.f32 %v40, %v36
    %v43 = vmul.f32 %v40, %v37
    %v44 = vmul.f32 %v40, %v38
    %v45 = vmul.f32 %v40, %v39
    %v46 = vstv %s31
    %v47 = vadd.f32 %v41, %v46
    %v48 = vadd.f32 %v42, %v46
    %v49 = vadd.f32 %v43, %v46
    %v50 = vadd.f32 %v44, %v46
    %v51 = vadd.f32 %v45, %v46
    %vm52 = vcmp.ge.f32.partialorder %v47, 0.0
    %vm53 = vcmp.ge.f32.partialorder %v48, 0.0
    %vm54 = vcmp.ge.f32.partialorder %v49, 0.0
    %vm55 = vcmp.ge.f32.partialorder %v50, 0.0
    %vm56 = vcmp.ge.f32.partialorder %v51, 0.0
    %v57 = vmul.f32 %v47, 0.01
    %v58 = vmul.f32 %v48, 0.01
    %v59 = vmul.f32 %v49, 0.01
    %v60 = vmul.f32 %v50, 0.01
    %v61 = vmul.f32 %v51, 0.01
    %v62 = vsel %vm52, %v47, %v57
    %v63 = vsel %vm53, %v48, %v58
    %v64 = vsel %vm54, %v49, %v59
    %v65 = vsel %vm55, %v50, %v60
    %v66 = vsel %vm56, %v51, %v61
    %v67 = vrot.slane %v62, 1
    %v68 = vrot.slane %v63, 1
    %v69 = vrot.slane %v64, 1
    %v70 = vrot.slane %v65, 1
    %v71 = vrot.slane %v66, 1
    %v72 = vlaneseq
    %v73 = vshrl.u32 %v72, 7
    %vm74 = vcmp.lt.s32.totalorder %v73, 7
    %v75 = vsel %vm74, %v70, %v71
    %v76 = vsel %vm74, %v69, %v70
    %v77 = vsel %vm74, %v68, %v69
    %v78 = vsel %vm74, %v67, %v68
    %v79 = vsel %vm74, %v71, %v67
    %v80 = vstv %s32
    %v81 = vmul.f32 %v80, %v62
    %v82 = vmul.f32 %v80, %v63
    %v83 = vmul.f32 %v80, %v64
    %v84 = vmul.f32 %v80, %v65
    %v85 = vmul.f32 %v80, %v66
    %v86 = vstv %s33
    %v87 = vmul.f32 %v86, %v78
    %v88 = vmul.f32 %v86, %v77
    %v89 = vmul.f32 %v86, %v76
    %v90 = vmul.f32 %v86, %v75
    %v91 = vmul.f32 %v86, %v79
    %v92 = vadd.f32 %v81, %v87
    %v93 = vadd.f32 %v82, %v88
    %v94 = vadd.f32 %v83, %v89
    %v95 = vadd.f32 %v84, %v90
    %v96 = vadd.f32 %v85, %v91
    %v97 = vstv %s34
    %v98 = vadd.f32 %v92, %v97
    %v99 = vadd.f32 %v93, %v97
    %v100 = vadd.f32 %v94, %v97
    %v101 = vadd.f32 %v95, %v97
    %v102 = vadd.f32 %v96, %v97
    %vm103 = vcmp.ge.f32.partialorder %v98, 0.0
    %vm104 = vcmp.ge.f32.partialorder %v99, 0.0
    %vm105 = vcmp.ge.f32.partialorder %v100, 0.0
    %vm106 = vcmp.ge.f32.partialorder %v101, 0.0
    %vm107 = vcmp.ge.f32.partialorder %v102, 0.0
    %v108 = vmul.f32 %v98, 0.01
    %v109 = vmul.f32 %v99, 0.01
    %v110 = vmul.f32 %v100, 0.01
    %v111 = vmul.f32 %v101, 0.01
    %v112 = vmul.f32 %v102, 0.01
    %v113 = vsel %vm103, %v98, %v108
    %v114 = vsel %vm104, %v99, %v109
    %v115 = vsel %vm105, %v100, %v110
    %v116 = vsel %vm106, %v101, %v111
    %v117 = vsel %vm107, %v102, %v112
    %v118 = vld [vmem:[%s2] sm:$0xff]
    %v119 = vld [vmem:[%s3] sm:$0xff]
    %121 = vset.pattern.permute.xlu0 0
    %122 = vperm.xlu0 %121, %v119
    %v123 = vpop.permute.xlu0 %122
    %vm125 = vcmask 326656
    %v127 = vsel %vm125, %v118, 0
    %129 = vmatprep.subr.mxu0 0.0
    %130 = vmatpush1.msra.mxu0 %v113
    %131 = vmatprep.subr.mxu0 0.0
    %132 = vmatpush1.msra.mxu0 %v114
    %133 = vmatprep.subr.mxu0 0.0
    %134 = vmatpush1.msra.mxu0 %v115
    %135 = vmatprep.subr.mxu0 0.0
    %136 = vmatpush1.msra.mxu0 %v116
    %137 = vmatprep.subr.mxu0 0.0
    %138 = vmatpush1.msra.mxu0 %v117
    %139 = vmatprep.subr.mxu0 0.0
    %140 = vmatpush1.msra.mxu0 0.0
    %141 = vmatprep.subr.mxu0 0.0
    %142 = vmatpush1.msra.mxu0 0.0
    %143 = vmatprep.subr.mxu0 0.0
    %144 = vmatpush1.msra.mxu0 0.0
    %145 = vmatprep.subr.mxu0 0.0
    %146 = vmatpush1.msra.mxu0 0.0
    %147 = vmatprep.subr.mxu0 0.0
    %148 = vmatpush1.msra.mxu0 0.0
    %149 = vmatprep.subr.mxu0 0.0
    %150 = vmatpush1.msra.mxu0 0.0
    %151 = vmatprep.subr.mxu0 0.0
    %152 = vmatpush1.msra.mxu0 0.0
    %153 = vmatprep.subr.mxu0 0.0
    %154 = vmatpush1.msra.mxu0 0.0
    %155 = vmatprep.subr.mxu0 0.0
    %156 = vmatpush1.msra.mxu0 0.0
    %157 = vmatprep.subr.mxu0 0.0
    %158 = vmatpush1.msra.mxu0 0.0
    %159 = vmatprep.subr.mxu0 0.0
    %160 = vmatpush1.msra.mxu0 0.0
    %161 = vmatprep.subr.mxu0 0.0
    %162 = vmatpush1.msra.mxu0 0.0
    %163 = vmatprep.subr.mxu0 0.0
    %164 = vmatpush1.msra.mxu0 0.0
    %165 = vmatprep.subr.mxu0 0.0
    %166 = vmatpush1.msra.mxu0 0.0
    %167 = vmatprep.subr.mxu0 0.0
    %168 = vmatpush1.msra.mxu0 0.0
    %169 = vmatprep.subr.mxu0 0.0
    %170 = vmatpush1.msra.mxu0 0.0
    %171 = vmatprep.subr.mxu0 0.0
    %172 = vmatpush1.msra.mxu0 0.0
    %173 = vmatprep.subr.mxu0 0.0
    %174 = vmatpush1.msra.mxu0 0.0
    %175 = vmatprep.subr.mxu0 0.0
    %176 = vmatpush1.msra.mxu0 0.0
    %177 = vmatprep.subr.mxu0 0.0
    %178 = vmatpush1.msra.mxu0 0.0
    %179 = vmatprep.subr.mxu0 0.0
    %180 = vmatpush1.msra.mxu0 0.0
    %181 = vmatprep.subr.mxu0 0.0
    %182 = vmatpush1.msra.mxu0 0.0
    %183 = vmatprep.subr.mxu0 0.0
    %184 = vmatpush1.msra.mxu0 0.0
    %185 = vmatprep.subr.mxu0 0.0
    %186 = vmatpush1.msra.mxu0 0.0
    %187 = vmatprep.subr.mxu0 0.0
    %188 = vmatpush1.msra.mxu0 0.0
    %189 = vmatprep.subr.mxu0 0.0
    %190 = vmatpush1.msra.mxu0 0.0
    %191 = vmatprep.subr.mxu0 0.0
    %192 = vmatpush1.msra.mxu0 0.0
    %193 = vmatprep.mubr.f32.mxu0 0.0
    %194 = vmatmul.mubr.f32.gmra.mrb[0].mxu0 %v127
    %v195 = vpop.f32.mrb[0].mxu0
    %v196 = vadd.f32 %v123, %v195
    %v197 = vpop.f32.mrb[0].mxu0
    %198 = vdwg.mxu0
    %199 = vst [vmem:[%s4] sm:$0xff] %v196
    // Predicated region
    $region22: #{_forward_impl.1} parent=1 // pred_check
      _
    $region23: #{_forward_impl.1} parent=1 // pred_check_branch
      %201 = sbr.rel (0) target = $region25
    $region24: #{_forward_impl.1} parent=1 // pred_region
      _
    $region25: #{_forward_impl.1} parent=1 // pred_fallthru
      _
    // Predicated region
    $region26: #{_forward_impl.1} parent=1 // pred_check
      _
    $region27: #{_forward_impl.1} parent=1 // pred_check_branch
      %203 = sbr.rel (0) target = $region29
    $region28: #{_forward_impl.1} parent=1 // pred_region
      _
    $region29: #{_forward_impl.1} parent=1 // pred_fallthru
      _
    %204 = vsyncpa [#allocation3], 1

</llo_original>
